<compile_context>
chip_gen: v6e
topology: v6e:2x2x1
jax: 0.10.0
libtpu: 0.0.40
codegen_flags: <defaults>
</compile_context>

<pallas_src>
import jax
import jax.numpy as jnp
from jax.experimental import pallas as pl
from jax.experimental.pallas import tpu as pltpu

GAMMA = 0.9
ALPHA = 1.0 / (1.0 - GAMMA)  # 10.0

LANES = 128
SUBLANES = 8


def _scale_kernel(x_ref, o_ref):
    # One VPU multiply per vreg, in the input's native dtype (weak-typed Python
    # ALPHA => bf16 stays bf16).  The astype is a no-op.
    o_ref[...] = (x_ref[...] * ALPHA).astype(o_ref.dtype)


# ----------------------------- wrapper helpers ------------------------------

def _cdiv(a, b):
    return -(-a // b)


def _round_up(a, m):
    return _cdiv(a, m) * m


def _vmem_limit(block_bytes):
    """Generation-aware VMEM budget: 1 in + 1 out, double-buffered, + headroom."""
    try:
        phys = int(pltpu.get_tpu_info().vmem_capacity_bytes)
    except Exception:
        phys = 64 << 20  # assume the smallest (v7x per-TensorCore) VMEM
    cap = (phys // 4) * 3            # leave 25% headroom below physical VMEM
    want = 4 * block_bytes + (2 << 20)
    return int(min(cap, max(16 << 20, want)))


def _min_steps(total_bytes):
    # >=4 steps (2 per v7x TensorCore) once pipelining pays off; >=2 steps for
    # read/write DMA overlap on single-core chips; 1 step below that.
    if total_bytes >= (2 << 20):
        return 4
    if total_bytes >= (1 << 20):
        return 2
    return 1


def _pick_tile_rows(rows, cap, row_mult, min_steps):
    """Pick a sublane-aligned row-tile; prefer an exactly balanced, full split."""
    cap = max(row_mult, cap)
    if rows <= row_mult or (rows <= cap and min_steps <= 1):
        return rows  # single full-dim block is always legal
    steps_lo = max(min_steps, _cdiv(rows, cap))
    # Exactly balanced split: every block full-sized, aligned, identical.
    for steps in range(steps_lo, steps_lo + 16):
        if steps > rows:
            break
        tile = rows // steps
        if rows % steps == 0 and tile % row_mult == 0 and 0 < tile <= cap:
            return tile
    # Fallback: aligned blocks, last one possibly partial (masked) — bulk stays
    # full and unmasked.
    tile = _round_up(_cdiv(rows, steps_lo), row_mult)
    return min(max(row_mult, min(tile, cap)), rows)


# ------------------------------- main paths ---------------------------------

def _scale_2d(x, n, itemsize, total_bytes, row_mult, target_block_bytes):
    """n % 128 == 0: lane-dense 2D slab via a free (bitcast) reshape."""
    orig_shape = x.shape
    cols = LANES
    for c in (2048, 1024, 512, 256, 128):
        if n % c == 0:
            cols = c
            break
    rows = n // cols
    x2d = x.reshape(rows, cols)

    bytes_per_row = cols * itemsize
    cap = max(row_mult, (target_block_bytes // bytes_per_row) // row_mult * row_mult)
    tile_rows = _pick_tile_rows(rows, cap, row_mult, _min_steps(total_bytes))
    grid = (_cdiv(rows, tile_rows),)
    vmem_limit = _vmem_limit(tile_rows * bytes_per_row)

    out2d = pl.pallas_call(
        _scale_kernel,
        out_shape=jax.ShapeDtypeStruct((rows, cols), x.dtype),
        grid_spec=pltpu.PrefetchScalarGridSpec(
            num_scalar_prefetch=0,
            grid=grid,
            in_specs=[pl.BlockSpec((tile_rows, cols), lambda i: (i, 0))],
            out_specs=pl.BlockSpec((tile_rows, cols), lambda i: (i, 0)),
        ),
        compiler_params=pltpu.CompilerParams(
            dimension_semantics=("parallel",),
            vmem_limit_bytes=vmem_limit,
        ),
    )(x2d)
    return out2d.reshape(orig_shape)


def _scale_ragged(x, itemsize, total_bytes, row_mult, target_block_bytes):
    """n % 128 != 0: no pad/slice — tile the leading axis, trailing dims whole."""
    orig_shape = x.shape
    if x.ndim >= 2:
        x2 = x.reshape(orig_shape[0], -1)   # collapse trailing dims: free bitcast
    else:
        x2 = x.reshape(1, -1)
    lead, rest = x2.shape
    row_bytes = rest * itemsize
    cap_bytes = min(target_block_bytes, 16 << 20)

    if lead == 1 or row_bytes * row_mult > cap_bytes:
        if total_bytes <= (8 << 20):
            b0 = lead                       # single whole-array block
        else:
            # TODO(synk): very large ragged input with an untileable leading
            # axis — needs a masked-tail manual-DMA kernel; XLA fallback avoids
            # reintroducing the pad+slice extra HBM passes.
            return x * ALPHA
    else:
        b0 = min(lead, max(1, cap_bytes // row_bytes))
        ms = _min_steps(total_bytes)
        if ms > 1:
            b0 = min(b0, _cdiv(lead, ms))
        b0 = max(row_mult, (b0 // row_mult) * row_mult)
        if b0 >= lead:
            b0 = lead

    grid = (_cdiv(lead, b0),)
    vmem_limit = _vmem_limit(b0 * row_bytes)

    out2 = pl.pallas_call(
        _scale_kernel,
        out_shape=jax.ShapeDtypeStruct((lead, rest), x.dtype),
        grid_spec=pltpu.PrefetchScalarGridSpec(
            num_scalar_prefetch=0,
            grid=grid,
            in_specs=[pl.BlockSpec((b0, rest), lambda i: (i, 0))],
            out_specs=pl.BlockSpec((b0, rest), lambda i: (i, 0)),
        ),
        compiler_params=pltpu.CompilerParams(
            dimension_semantics=("parallel",),
            vmem_limit_bytes=vmem_limit,
        ),
    )(x2)
    return out2.reshape(orig_shape)


def scale_layer(x, *, target_block_bytes=8 << 20, min_pallas_bytes=1 << 20,
                force_pallas=False):
    """y = alpha * x (alpha = 10.0) via a Pallas TPU kernel for any shape/dtype."""
    n = x.size
    itemsize = jnp.dtype(x.dtype).itemsize
    total_bytes = n * itemsize

    if n == 0:
        return x * ALPHA

    # Small inputs: dispatch/pipeline overhead dominates — let XLA fuse it.
    if total_bytes < min_pallas_bytes and not force_pallas:
        return x * ALPHA

    # Sublane packing: 8 rows f32, 16 bf16, 32 int8/fp8.
    row_mult = SUBLANES * max(1, 4 // itemsize)

    if n % LANES == 0:
        return _scale_2d(x, n, itemsize, total_bytes, row_mult, target_block_bytes)
    return _scale_ragged(x, itemsize, total_bytes, row_mult, target_block_bytes)


if __name__ == "__main__":
    key = jax.random.PRNGKey(0)
    # NCHW activations: batch=2, channels=4, spatial=16x16 (small spec shapes).
    x = jax.random.normal(key, (2, 4, 16, 16), dtype=jnp.float32)

    # Force the Pallas path so the kernel is exercised even below the cutoff.
    y = jax.block_until_ready(scale_layer(x, force_pallas=True))
    assert jnp.allclose(y, ALPHA * x, atol=1e-6, rtol=1e-6), "pallas mismatch"

    # Default path on the same input (small => XLA fast path, same numerics).
    y_fast = jax.block_until_ready(scale_layer(x))
    assert jnp.allclose(y_fast, ALPHA * x, atol=1e-6, rtol=1e-6), "xla-path mismatch"

    # 2 MiB input: exercises the balanced >=4-step lane-dense grid.
    x_big = jax.random.normal(jax.random.PRNGKey(1), (4, 32, 64, 64), dtype=jnp.float32)
    y_big = jax.block_until_ready(scale_layer(x_big))
    assert jnp.allclose(y_big, ALPHA * x_big, atol=1e-5, rtol=1e-5), "big mismatch"

    # Ragged (n % 128 != 0): leading-axis tiling, no pad / no slice.
    x_rag = jax.random.normal(jax.random.PRNGKey(2), (3, 5, 7), dtype=jnp.float32)
    y_rag = jax.block_until_ready(scale_layer(x_rag, force_pallas=True))
    assert jnp.allclose(y_rag, ALPHA * x_rag, atol=1e-6, rtol=1e-6), "ragged mismatch"

    # bf16 stays in-dtype (no f32 round trip).
    x_bf = jax.random.normal(jax.random.PRNGKey(3), (2, 4, 16, 16)).astype(jnp.bfloat16)
    y_bf = jax.block_until_ready(scale_layer(x_bf, force_pallas=True))
    assert jnp.allclose(y_bf.astype(jnp.float32), (x_bf * ALPHA).astype(jnp.float32),
                        atol=1e-2, rtol=1e-2), "bf16 mismatch"

    print("KERNEL_OK")
</pallas_src>

<mosaic_0001>
module attributes {stable_mosaic.version = 11 : i64} {
  func.func @_scale_kernel(%arg0: i32, %arg1: memref<1x2048xf32, #tpu.memory_space<vmem>>, %arg2: memref<1x2048xf32, #tpu.memory_space<vmem>>) attributes {dimension_semantics = [#tpu.dimension_semantics<parallel>], iteration_bounds = array<i64: 1>, scalar_prefetch = 0 : i64, scratch_operands = 0 : i64, tpu.core_type = #tpu.core_type<tc>, window_params = [{transform_indices = @transform_0, window_bounds = array<i64: 1, 2048>}, {transform_indices = @transform_1, window_bounds = array<i64: 1, 2048>}]} {
    %c0 = arith.constant 0 : index
    %c0_0 = arith.constant 0 : index
    %0 = vector.load %arg1[%c0, %c0_0] : memref<1x2048xf32, #tpu.memory_space<vmem>>, vector<1x2048xf32>
    %cst = arith.constant 1.000000e+01 : f32
    %1 = vector.broadcast %cst : f32 to vector<1x2048xf32>
    %2 = arith.mulf %0, %1 : vector<1x2048xf32>
    %c0_1 = arith.constant 0 : index
    %c0_2 = arith.constant 0 : index
    %3 = vector.load %arg2[%c0_1, %c0_2] : memref<1x2048xf32, #tpu.memory_space<vmem>>, vector<1x2048xf32>
    tpu.vector_store %arg2[%c0_1, %c0_2], %2 {strides = array<i32>} : memref<1x2048xf32, #tpu.memory_space<vmem>>, vector<1x2048xf32>,
    return
  }
  func.func @transform_0(%arg0: i32) -> (i32, i32) {
    %c0_i32 = arith.constant 0 : i32
    %c0_i32_0 = arith.constant 0 : i32
    return %arg0, %c0_i32 : i32, i32
  }
  func.func @transform_1(%arg0: i32) -> (i32, i32) {
    %c0_i32 = arith.constant 0 : i32
    %c0_i32_0 = arith.constant 0 : i32
    return %arg0, %c0_i32 : i32, i32
  }
}

</mosaic_0001>

<llo_original>
// kernel: tpu_custom_call.1
$region0: #{tpu_custom_call.1}
  #allocation0 [shape = 'u32[]', space=smem, size = 0x4, offset = 0x4, fixed_abs, tag = 'smem constant byte address 0x4 - core index']
  #allocation1 [shape = 'u32[144,128]{1,0:T(1,128)}', space=vmem, size = 0x12000, scoped, tag = 'internal scratch']
  %s0 = inlined_call_operand.hbm [shape: f32[1,2048], index: 0, kind: input, shape index: {}]
  %s1 = inlined_call_operand.hbm [shape: f32[1,2048], index: 1, kind: output, shape index: {}]
  %s2 = sld [smem:[#allocation0]]
  $region18: #{tpu_custom_call.1} parent=0
    _
  %s4 = ssub.s32 1, %s2
  %s5 = scalar_select 0, %s4, %s2
  $region1: #{tpu_custom_call.1} parent=0
    #allocation2 [shape = 'u8[8192]{0}', space=vmem, size = 0x2000, scoped, tag = 'input window, operand 0, single buffered']
    #allocation3 [shape = 's32[1]{0}', space=sflag, size = 0x4, scoped, tag = 'scoped memory for tpu_custom_call.1']
    #allocation4 [shape = 's32[1]{0}', space=sflag, size = 0x4, scoped, tag = 'scoped memory for tpu_custom_call.1']
    #allocation5 [shape = 'u8[8192]{0}', space=vmem, size = 0x2000, scoped, tag = 'output window, operand 0, single buffered']
    %6 = vsyncpa [#allocation3], 0
    %7 = vsyncpa [#allocation4], 0
    // Predicated region
    $region2: #{tpu_custom_call.1} parent=1 // pred_check
      _
    $region3: #{tpu_custom_call.1} parent=1 // pred_check_branch
      %9 = sbr.rel (0) target = $region5
    $region4: #{tpu_custom_call.1} parent=1 // pred_region
      %s11 = ssub.s32 256, 256
      %12 = vsyncadd [#allocation3], %s11
      %s14 = sshll.u32 [#allocation2], 4
      %s15 = int_to_ptr.vmem [resolvable:$true] %s14
      %17 = dma.hbm_to_vmem [thread:$0]  %s0, 256, %s15, [#allocation3]
    $region5: #{tpu_custom_call.1} parent=1 // pred_fallthru
      _
    // Predicated region
    $region6: #{tpu_custom_call.1} parent=1 // pred_check
      _
    $region7: #{tpu_custom_call.1} parent=1 // pred_check_branch
      %19 = sbr.rel (0) target = $region9
    $region8: #{tpu_custom_call.1} parent=1 // pred_region
      %20 = dma.done [#allocation3], 256
    $region9: #{tpu_custom_call.1} parent=1 // pred_fallthru
      _
    %v21 = vld [vmem:[#allocation2] sm:$0xff]
    %v22 = vld [vmem:[#allocation2 + $0x8] sm:$0xff]
    %v23 = vmul.f32 %v21, 10.0
    %v24 = vmul.f32 %v22, 10.0
    %25 = vst [vmem:[#allocation5] sm:$0xff] %v23
    %26 = vst [vmem:[#allocation5 + $0x8] sm:$0xff] %v24
    // Predicated region
    $region10: #{tpu_custom_call.1} parent=1 // pred_check
      _
    $region11: #{tpu_custom_call.1} parent=1 // pred_check_branch
      %28 = sbr.rel (0) target = $region13
    $region12: #{tpu_custom_call.1} parent=1 // pred_region
      %s30 = ssub.s32 256, 256
      %31 = vsyncadd [#allocation4], %s30
      %s33 = sshll.u32 [#allocation5], 4
      %s34 = int_to_ptr.vmem [resolvable:$true] %s33
      %36 = dma.vmem_to_hbm [thread:$0]  %s34, 256, %s1, [#allocation4]
    $region13: #{tpu_custom_call.1} parent=1 // pred_fallthru
      _
    // Predicated region
    $region14: #{tpu_custom_call.1} parent=1 // pred_check
      _
    $region15: #{tpu_custom_call.1} parent=1 // pred_check_branch
      %38 = sbr.rel (0) target = $region17
    $region16: #{tpu_custom_call.1} parent=1 // pred_region
      %39 = dma.done [#allocation4], 256
    $region17: #{tpu_custom_call.1} parent=1 // pred_fallthru
      _
    %40 = vsyncpa [#allocation3], 1
    %41 = vsyncpa [#allocation4], 1

</llo_original>
